<compile_context>
chip_gen: v6e
topology: v6e:2x2x1
jax: 0.10.0
libtpu: 0.0.40
codegen_flags: <defaults>
</compile_context>

<pallas_src>
import functools

import jax
import jax.numpy as jnp
from jax.experimental import pallas as pl
from jax.experimental.pallas import tpu as pltpu


# --------------------------------------------------------------------------- #
# Dense path: lane-dense (D, H*H) slab, TB blocks per grid step.
# --------------------------------------------------------------------------- #
def _dense_select_kernel(mask_ref, x_ref, o_ref, *, H):
    # mask_ref : VMEM (TB, 1)   int32  (0 = keep block, nonzero = replace with eye)
    # x_ref    : VMEM (TB, H*H) input blocks, each HxH block flattened along lanes
    # o_ref    : VMEM (TB, H*H) output blocks
    hh = x_ref.shape[-1]
    # Flattened HxH identity: diagonal entries sit at flat index k*(H+1).
    lane = jax.lax.broadcasted_iota(jnp.int32, (1, hh), 1)
    eye_row = (lane % (H + 1) == 0).astype(o_ref.dtype)   # (1, H*H), constant per step
    keep = mask_ref[...] == 0                              # (TB, 1) bool
    o_ref[...] = jnp.where(keep, x_ref[...], eye_row)      # stays in x dtype (bf16 safe)


def _choose_block_rows(d, row_bytes, target_bytes=2 * 1024 * 1024):
    """How many HxH blocks (rows of the (D, H*H) slab) to process per grid step.

    Targets ~2 MiB tiles: big enough to amortize the ~0.35us per-step pipeline
    overhead and reach ~85% of HBM roofline, small enough that double-buffered
    in/out tiles fit in the default scoped VMEM on v5e/v6e/v7x (no vmem_limit bump,
    no extra multi-buffering needed).
    """
    tb = max(1, target_bytes // max(1, row_bytes))
    if tb >= d:
        return d
    tb = max(8, (tb // 8) * 8)      # keep the sublane dim a multiple of 8
    return min(tb, d)


def _dense_select(x, mask, block_rows=None):
    d, h, _ = x.shape
    hh = h * h
    x2 = x.reshape(d, hh)                               # lane-dense output layout
    mask2 = mask.reshape(d, 1).astype(jnp.int32)

    tb = block_rows if block_rows is not None else _choose_block_rows(
        d, hh * x.dtype.itemsize)
    tb = min(tb, d)
    grid = (pl.cdiv(d, tb),)

    out2 = pl.pallas_call(
        functools.partial(_dense_select_kernel, H=h),
        out_shape=jax.ShapeDtypeStruct((d, hh), x.dtype),
        grid=grid,
        in_specs=[
            pl.BlockSpec((tb, 1), lambda i: (i, 0)),    # per-block mask (VMEM vector)
            pl.BlockSpec((tb, hh), lambda i: (i, 0)),   # x slab
        ],
        out_specs=pl.BlockSpec((tb, hh), lambda i: (i, 0)),
        compiler_params=pltpu.CompilerParams(
            # Independent tiles: lets v7x shard the axis across both TensorCores;
            # neutral on v5e/v6e.
            dimension_semantics=("parallel",),
        ),
    )(mask2, x2)
    return out2.reshape(d, h, h)


# --------------------------------------------------------------------------- #
# In-place scatter path: write identity only into the replaced blocks.
# --------------------------------------------------------------------------- #
def _scatter_eye_kernel(idx_ref, x_hbm_ref, o_ref):
    # idx_ref   : SMEM (n,) int32 scalar-prefetch (consumed by the output index_map)
    # x_hbm_ref : raw HBM ref of x, aliased to the output; never read here
    # o_ref     : VMEM (1, H, H) output block at row idx_ref[i]
    del idx_ref, x_hbm_ref
    h = o_ref.shape[-1]
    rows = jax.lax.broadcasted_iota(jnp.int32, (1, h, h), 1)
    cols = jax.lax.broadcasted_iota(jnp.int32, (1, h, h), 2)
    o_ref[...] = (rows == cols).astype(o_ref.dtype)


def _scatter_eye_inplace(x, replace_idx):
    d, h, _ = x.shape
    n = replace_idx.shape[0]
    grid_spec = pltpu.PrefetchScalarGridSpec(
        num_scalar_prefetch=1,
        grid=(n,),
        in_specs=[pl.BlockSpec(memory_space=pl.ANY)],   # x stays in HBM, no auto-DMA
        out_specs=pl.BlockSpec((1, h, h), lambda i, idx: (idx[i], 0, 0)),
    )
    return pl.pallas_call(
        _scatter_eye_kernel,
        out_shape=jax.ShapeDtypeStruct((d, h, h), x.dtype),
        grid_spec=grid_spec,
        # x (operand 1, counting the scalar-prefetch indices) aliases output 0:
        # only the selected blocks are written, all other blocks keep x's values.
        input_output_aliases={1: 0},
        compiler_params=pltpu.CompilerParams(
            dimension_semantics=("arbitrary",),
        ),
    )(replace_idx, x)


# --------------------------------------------------------------------------- #
# Public wrapper (forward pass of MultiplicativeDropoutLayer).
# --------------------------------------------------------------------------- #
def multiplicative_dropout(x, p=0.0, *, training=True, key=None, method="dense",
                           block_rows=None):
    """JAX/Pallas equivalent of MultiplicativeDropoutLayer.forward.

    x: (D, H, H) array. Returns an array of the same shape and dtype.

    method:
      "dense"           one streaming select pass over x (default, always safe).
      "scatter_inplace" output aliases x and only the replaced blocks are written
                        (minimal HBM traffic); callers should donate x and must not
                        rely on reusing the input buffer afterwards.
    """
    if not training:
        return x
    if x.shape[-1] != x.shape[-2]:
        raise ValueError("The last two dimensions of input should be the same!")
    d = x.shape[0]
    if d == 1:
        return x

    num_to_replace = int(p * d)
    if num_to_replace <= 0:
        return x                       # nothing to drop out: skip the kernel entirely
    if key is None:
        raise ValueError("A PRNG `key` must be provided in training mode.")

    # Random subset of exactly int(p*D) blocks (same distribution as the torch
    # module's shuffled 0/1 mask).
    perm = jax.random.permutation(key, d)
    replace_idx = perm[:num_to_replace].astype(jnp.int32)

    if method == "scatter_inplace":
        return _scatter_eye_inplace(x, replace_idx)
    elif method == "dense":
        mask = jnp.zeros((d,), jnp.int32).at[replace_idx].set(1)
        return _dense_select(x, mask, block_rows=block_rows)
    else:
        raise ValueError(f"unknown method: {method!r}")


# --------------------------------------------------------------------------- #
# Reference + tests
# --------------------------------------------------------------------------- #
def _reference(x, p, key):
    d, h, _ = x.shape
    n = int(p * d)
    if n == 0 or d == 1:
        return x
    perm = jax.random.permutation(key, d)
    mask = jnp.zeros((d,), bool).at[perm[:n]].set(True).reshape(d, 1, 1)
    eye = jnp.eye(h, dtype=x.dtype)
    return jnp.where(mask, eye, x)


if __name__ == "__main__":
    root = jax.random.PRNGKey(0)
    k_x, k_mask, k_x2, k_x3 = jax.random.split(root, 4)

    # --- Test 1: small f32, dense path and in-place scatter path ------------
    D, H, p = 8, 16, 0.5
    x = jax.random.normal(k_x, (D, H, H), dtype=jnp.float32)

    out_dense = jax.block_until_ready(
        multiplicative_dropout(x, p=p, training=True, key=k_mask))
    out_scatter = jax.block_until_ready(
        multiplicative_dropout(x, p=p, training=True, key=k_mask,
                               method="scatter_inplace"))

    ref = _reference(x, p, k_mask)
    assert out_dense.shape == x.shape and out_dense.dtype == x.dtype
    assert jnp.array_equal(out_dense, ref), "dense path mismatch vs reference"
    assert jnp.array_equal(out_scatter, ref), "scatter path mismatch vs reference"

    # --- Test 2: multi-step grid with a partial last tile -------------------
    D2, H2, p2 = 40, 16, 0.25
    x2 = jax.random.normal(k_x2, (D2, H2, H2), dtype=jnp.float32)
    out2 = multiplicative_dropout(x2, p=p2, training=True, key=k_mask,
                                  block_rows=16)          # grid = cdiv(40,16) = 3
    assert jnp.array_equal(out2, _reference(x2, p2, k_mask)), "tiled path mismatch"

    # --- Test 3: bf16 dtype (pure select, no f32 promotion) -----------------
    D3, H3, p3 = 32, 16, 0.25
    x3 = jax.random.normal(k_x3, (D3, H3, H3), dtype=jnp.float32).astype(jnp.bfloat16)
    out3 = multiplicative_dropout(x3, p=p3, training=True, key=k_mask)
    assert out3.dtype == jnp.bfloat16
    assert jnp.array_equal(out3, _reference(x3, p3, k_mask)), "bf16 path mismatch"

    # --- Eval mode / p too small are no-ops (no kernel launch) --------------
    assert jnp.array_equal(multiplicative_dropout(x, p=p, training=False), x)
    assert jnp.array_equal(
        multiplicative_dropout(x, p=0.05, training=True, key=k_mask), x)  # int(0.05*8)=0

    print("KERNEL_OK")
</pallas_src>

<mosaic_0001>
module attributes {stable_mosaic.version = 11 : i64} {
  func.func @_dense_select_kernel(%arg0: i32, %arg1: memref<8x1xi32, #tpu.memory_space<vmem>>, %arg2: memref<8x256xf32, #tpu.memory_space<vmem>>, %arg3: memref<8x256xf32, #tpu.memory_space<vmem>>) attributes {dimension_semantics = [#tpu.dimension_semantics<parallel>], iteration_bounds = array<i64: 1>, scalar_prefetch = 0 : i64, scratch_operands = 0 : i64, tpu.core_type = #tpu.core_type<tc>, window_params = [{transform_indices = @transform_0, window_bounds = array<i64: 8, 1>}, {transform_indices = @transform_1, window_bounds = array<i64: 8, 256>}, {transform_indices = @transform_2, window_bounds = array<i64: 8, 256>}]} {
    %0 = tpu.iota {dimensions = array<i32: 1>} : vector<1x256xi32>
    %c17_i32 = arith.constant 17 : i32
    %c0_i32 = arith.constant 0 : i32
    %1 = arith.cmpi eq, %c17_i32, %c0_i32 : i32
    %c1_i32 = arith.constant 1 : i32
    %2 = arith.select %1, %c1_i32, %c17_i32 : i32
    %3 = vector.broadcast %2 : i32 to vector<1x256xi32>
    %4 = arith.remsi %0, %3 : vector<1x256xi32>
    %c0_i32_0 = arith.constant 0 : i32
    %5 = vector.broadcast %c0_i32_0 : i32 to vector<1x256xi32>
    %6 = arith.cmpi ne, %4, %5 : vector<1x256xi32>
    %c0_i32_1 = arith.constant 0 : i32
    %7 = vector.broadcast %c0_i32_1 : i32 to vector<1x256xi32>
    %8 = arith.cmpi slt, %4, %7 : vector<1x256xi32>
    %c0_i32_2 = arith.constant 0 : i32
    %9 = arith.cmpi slt, %2, %c0_i32_2 : i32
    %10 = vector.broadcast %9 : i1 to vector<1x256xi1>
    %11 = vector.broadcast %10 : vector<1x256xi1> to vector<1x256xi1>
    %12 = arith.xori %8, %11 : vector<1x256xi1>
    %13 = arith.andi %12, %6 : vector<1x256xi1>
    %14 = vector.broadcast %2 : i32 to vector<1x256xi32>
    %15 = arith.addi %4, %14 : vector<1x256xi32>
    %16 = arith.select %13, %15, %4 : vector<1x256xi1>, vector<1x256xi32>
    %c0_i32_3 = arith.constant 0 : i32
    %17 = vector.broadcast %c0_i32_3 : i32 to vector<1x256xi32>
    %18 = arith.cmpi eq, %16, %17 : vector<1x256xi32>
    %19 = arith.extui %18 : vector<1x256xi1> to vector<1x256xi32>
    %20 = arith.sitofp %19 : vector<1x256xi32> to vector<1x256xf32>
    %c0 = arith.constant 0 : index
    %c0_4 = arith.constant 0 : index
    %21 = vector.load %arg1[%c0, %c0_4] : memref<8x1xi32, #tpu.memory_space<vmem>>, vector<8x1xi32>
    %c0_i32_5 = arith.constant 0 : i32
    %22 = vector.broadcast %c0_i32_5 : i32 to vector<8x1xi32>
    %23 = arith.cmpi eq, %21, %22 : vector<8x1xi32>
    %c0_6 = arith.constant 0 : index
    %c0_7 = arith.constant 0 : index
    %24 = vector.load %arg2[%c0_6, %c0_7] : memref<8x256xf32, #tpu.memory_space<vmem>>, vector<8x256xf32>
    %25 = vector.shape_cast %23 : vector<8x1xi1> to vector<8x1xi1>
    %26 = vector.broadcast %25 : vector<8x1xi1> to vector<8x256xi1>
    %27 = vector.shape_cast %20 : vector<1x256xf32> to vector<1x256xf32>
    %28 = vector.broadcast %27 : vector<1x256xf32> to vector<8x256xf32>
    %29 = arith.select %26, %24, %28 : vector<8x256xi1>, vector<8x256xf32>
    %c0_8 = arith.constant 0 : index
    %c0_9 = arith.constant 0 : index
    %30 = vector.load %arg3[%c0_8, %c0_9] : memref<8x256xf32, #tpu.memory_space<vmem>>, vector<8x256xf32>
    tpu.vector_store %arg3[%c0_8, %c0_9], %29 {strides = array<i32>} : memref<8x256xf32, #tpu.memory_space<vmem>>, vector<8x256xf32>,
    return
  }
  func.func @transform_0(%arg0: i32) -> (i32, i32) {
    %c0_i32 = arith.constant 0 : i32
    %c0_i32_0 = arith.constant 0 : i32
    return %arg0, %c0_i32 : i32, i32
  }
  func.func @transform_1(%arg0: i32) -> (i32, i32) {
    %c0_i32 = arith.constant 0 : i32
    %c0_i32_0 = arith.constant 0 : i32
    return %arg0, %c0_i32 : i32, i32
  }
  func.func @transform_2(%arg0: i32) -> (i32, i32) {
    %c0_i32 = arith.constant 0 : i32
    %c0_i32_0 = arith.constant 0 : i32
    return %arg0, %c0_i32 : i32, i32
  }
}

</mosaic_0001>

<llo_original>
// kernel: tpu_custom_call.1
$region0: #{tpu_custom_call.1}
  #allocation0 [shape = 'u32[]', space=smem, size = 0x4, offset = 0x4, fixed_abs, tag = 'smem constant byte address 0x4 - core index']
  #allocation1 [shape = 'u32[144,128]{1,0:T(1,128)}', space=vmem, size = 0x12000, scoped, tag = 'internal scratch']
  %s0 = inlined_call_operand.vmem [shape: s32[8,1], index: 0, kind: input, shape index: {}]
  %s1 = inlined_call_operand.hbm [shape: f32[8,256], index: 1, kind: input, shape index: {}]
  %s2 = inlined_call_operand.hbm [shape: f32[8,256], index: 2, kind: output, shape index: {}]
  %s3 = sld [smem:[#allocation0]]
  $region22: #{tpu_custom_call.1} parent=0
    _
  %s5 = ssub.s32 1, %s3
  %s6 = scalar_select 0, %s5, %s3
  $region1: #{tpu_custom_call.1} parent=0
    #allocation2 [shape = 'u8[8192]{0}', space=vmem, size = 0x2000, scoped, tag = 'input window, operand 1, single buffered']
    #allocation3 [shape = 's32[1]{0}', space=sflag, size = 0x4, scoped, tag = 'scoped memory for tpu_custom_call.1']
    #allocation4 [shape = 's32[1]{0}', space=sflag, size = 0x4, scoped, tag = 'scoped memory for tpu_custom_call.1']
    #allocation5 [shape = 'u8[8192]{0}', space=vmem, size = 0x2000, scoped, tag = 'output window, operand 0, single buffered']
    %7 = vsyncpa [#allocation3], 0
    %8 = vsyncpa [#allocation4], 0
    // Predicated region
    $region2: #{tpu_custom_call.1} parent=1 // pred_check
      _
    $region3: #{tpu_custom_call.1} parent=1 // pred_check_branch
      %10 = sbr.rel (0) target = $region5
    $region4: #{tpu_custom_call.1} parent=1 // pred_region
      _
    $region5: #{tpu_custom_call.1} parent=1 // pred_fallthru
      _
    // Predicated region
    $region6: #{tpu_custom_call.1} parent=1 // pred_check
      _
    $region7: #{tpu_custom_call.1} parent=1 // pred_check_branch
      %12 = sbr.rel (0) target = $region9
    $region8: #{tpu_custom_call.1} parent=1 // pred_region
      %s14 = ssub.s32 256, 256
      %15 = vsyncadd [#allocation3], %s14
      %s17 = sshll.u32 [#allocation2], 4
      %s18 = int_to_ptr.vmem [resolvable:$true] %s17
      %20 = dma.hbm_to_vmem [thread:$0]  %s1, 256, %s18, [#allocation3]
    $region9: #{tpu_custom_call.1} parent=1 // pred_fallthru
      _
    // Predicated region
    $region10: #{tpu_custom_call.1} parent=1 // pred_check
      _
    $region11: #{tpu_custom_call.1} parent=1 // pred_check_branch
      %22 = sbr.rel (0) target = $region13
    $region12: #{tpu_custom_call.1} parent=1 // pred_region
      %23 = dma.done [#allocation3], 256
    $region13: #{tpu_custom_call.1} parent=1 // pred_fallthru
      _
    %v24 = vlaneseq
    %v25 = vand.u32 %v24, 127
    %v26 = vadd.s32 %v25, 128
    %vm27 = vcmp.lt.s32.totalorder %v25, 0
    %v28 = vsub.s32 0, %v25
    %v29 = vsel %vm27, %v28, %v25
    %v30 = vmul.u32.u64.compose %v29, 4042322161
    %v31 = vextract.low.u32 %v30
    %v32 = vextract.high.u32 %v30
    %v33 = vshrl.u32 %v32, 4
    %v34 = vmul.u32 %v33, 17
    %v35 = vsub.s32 %v29, %v34
    %v36 = vsub.s32 0, %v35
    %v37 = vsel %vm27, %v36, %v35
    %vm38 = vcmp.lt.s32.totalorder %v26, 0
    %v39 = vsub.s32 0, %v26
    %v40 = vsel %vm38, %v39, %v26
    %v41 = vmul.u32.u64.compose %v40, 4042322161
    %v42 = vextract.low.u32 %v41
    %v43 = vextract.high.u32 %v41
    %v44 = vshrl.u32 %v43, 4
    %v45 = vmul.u32 %v44, 17
    %v46 = vsub.s32 %v40, %v45
    %v47 = vsub.s32 0, %v46
    %v48 = vsel %vm38, %v47, %v46
    %vm49 = vcmp.ne.s32.totalorder %v37, 0
    %vm50 = vcmp.ne.s32.totalorder %v48, 0
    %vm51 = vcmp.lt.s32.totalorder %v37, 0
    %vm52 = vcmp.lt.s32.totalorder %v48, 0
    %vm53 = vmand %vm51, %vm49
    %vm54 = vmand %vm52, %vm50
    %v55 = vadd.s32 %v37, 17
    %v56 = vadd.s32 %v48, 17
    %v57 = vsel %vm53, %v55, %v37
    %v58 = vsel %vm54, %v56, %v48
    %vm59 = vcmp.eq.s32.totalorder %v57, 0
    %vm60 = vcmp.eq.s32.totalorder %v58, 0
    %v61 = vsel %vm59, 1, 0
    %v62 = vsel %vm60, 1, 0
    %v63 = vcvt.s32.f32 %v61
    %v64 = vcvt.s32.f32 %v62
    %v65 = vld [vmem:[%s0] sm:$0xff]
    %vm66 = vcmp.eq.s32.totalorder %v65, 0
    %v67 = vld [vmem:[#allocation2] sm:$0xff]
    %v68 = vld [vmem:[#allocation2 + $0x8] sm:$0xff]
    %v69 = vsel %vm66, 1, 0
    %70 = vset.pattern.permute.xlu0 0
    %71 = vperm.xlu0 %70, %v69
    %v72 = vpop.permute.xlu0 %71
    %vm73 = vcmp.eq.s32.totalorder %v72, 1
    %v74 = vsel %vm73, %v67, %v63
    %v75 = vsel %vm73, %v68, %v64
    %76 = vst [vmem:[#allocation5] sm:$0xff] %v74
    %77 = vst [vmem:[#allocation5 + $0x8] sm:$0xff] %v75
    // Predicated region
    $region14: #{tpu_custom_call.1} parent=1 // pred_check
      _
    $region15: #{tpu_custom_call.1} parent=1 // pred_check_branch
      %79 = sbr.rel (0) target = $region17
    $region16: #{tpu_custom_call.1} parent=1 // pred_region
      %s81 = ssub.s32 256, 256
      %82 = vsyncadd [#allocation4], %s81
      %s84 = sshll.u32 [#allocation5], 4
      %s85 = int_to_ptr.vmem [resolvable:$true] %s84
      %87 = dma.vmem_to_hbm [thread:$0]  %s85, 256, %s2, [#allocation4]
    $region17: #{tpu_custom_call.1} parent=1 // pred_fallthru
      _
    // Predicated region
    $region18: #{tpu_custom_call.1} parent=1 // pred_check
      _
    $region19: #{tpu_custom_call.1} parent=1 // pred_check_branch
      %89 = sbr.rel (0) target = $region21
    $region20: #{tpu_custom_call.1} parent=1 // pred_region
      %90 = dma.done [#allocation4], 256
    $region21: #{tpu_custom_call.1} parent=1 // pred_fallthru
      _
    %91 = vsyncpa [#allocation3], 1
    %92 = vsyncpa [#allocation4], 1

</llo_original>
